<compile_context>
chip_gen: v5e
topology: v5e:2x2
jax: 0.10.0
libtpu: 0.0.40
codegen_flags: <defaults>
</compile_context>

<pallas_src>
import jax
import jax.numpy as jnp
from jax import lax
from jax.experimental import pallas as pl
from jax.experimental.pallas import tpu as pltpu


def _round_up(x, m):
    return ((x + m - 1) // m) * m


def _mlm_linear_kernel(x_ref, w_ref, b_ref, o_ref):
    """One (tm, tn) logits tile = x @ W.T + b in a single full-K MXU pass.

    x_ref: (tm, K)   activation panel (DMA skipped across the vocab axis)
    w_ref: (tn, K)   weight tile, PyTorch (vocab, hidden) layout (no transpose)
    b_ref: (1, tn)   bias tile
    o_ref: (tm, tn)  output tile
    """
    acc = lax.dot_general(
        x_ref[...],
        w_ref[...],
        dimension_numbers=(((1,), (1,)), ((), ())),  # contract hidden on both
        preferred_element_type=jnp.float32,
    )
    o_ref[...] = (acc + b_ref[...].astype(jnp.float32)).astype(o_ref.dtype)


def masked_language_model_forward(
    x,
    weight,
    bias,
    *,
    tm_max=1024,
    tn_max=2048,
    use_bf16_inputs=False,
    out_dtype=None,
    vmem_budget_bytes=44 * 1024 * 1024,
):
    """
    x:      (batch, seq, hidden)   float32
    weight: (vocab, hidden)        float32  (PyTorch nn.Linear layout)
    bias:   (vocab,)               float32
    returns (batch, seq, vocab)    out_dtype (defaults to x.dtype)
    """
    batch, seq, hidden = x.shape
    vocab = weight.shape[0]
    M, K, N = batch * seq, hidden, vocab

    out_dtype = out_dtype or x.dtype
    in_dtype = jnp.bfloat16 if use_bf16_inputs else x.dtype
    in_bytes = jnp.dtype(in_dtype).itemsize
    out_bytes = jnp.dtype(out_dtype).itemsize
    m_align = 16 if in_dtype == jnp.bfloat16 else 8

    # ---- tile selection: K is collapsed (full hidden); fill VMEM with tm/tn ----
    tm = min(M, tm_max)
    tn = min(N, tn_max)

    # Double-buffered working set: x panel + W panel (in_dtype) + output tile.
    def working_set(tm_, tn_):
        return 2 * ((tm_ + tn_) * K * in_bytes + tm_ * tn_ * out_bytes)

    while tn > 512 and working_set(tm, tn) > vmem_budget_bytes:
        tn = max(512, tn // 2)
    while tm > 256 and working_set(tm, tn) > vmem_budget_bytes:
        tm = max(256, tm // 2)

    # Alignment / padding only where an axis is actually tiled.
    if tm < M:
        tm = _round_up(tm, m_align)
        M_pad = _round_up(M, tm)
    else:
        tm, M_pad = M, M
    if tn < N:
        tn = _round_up(tn, 128)
        N_pad = _round_up(N, tn)
    else:
        tn, N_pad = N, N

    # ---- operand prep (HBM) ----
    x2d = x.reshape(M, K)
    w = weight
    if use_bf16_inputs:
        x2d = x2d.astype(jnp.bfloat16)
        w = w.astype(jnp.bfloat16)
    if M_pad != M:
        x2d = jnp.pad(x2d, ((0, M_pad - M), (0, 0)))
    b = bias
    if N_pad != N:
        w = jnp.pad(w, ((0, N_pad - N), (0, 0)))
        b = jnp.pad(b, (0, N_pad - N))
    b2d = b.reshape(1, N_pad)

    i_blocks = M_pad // tm
    j_blocks = N_pad // tn
    grid = (i_blocks, j_blocks)  # j (vocab) innermost -> x DMA skipped across j

    cost = pl.CostEstimate(
        flops=2 * M_pad * N_pad * K,
        transcendentals=0,
        bytes_accessed=(
            M_pad * K * in_bytes                         # x streamed once (resident over j)
            + N_pad * K * in_bytes * i_blocks            # W re-streamed once per i pass
            + N_pad * jnp.dtype(b2d.dtype).itemsize * i_blocks
            + M_pad * N_pad * out_bytes                  # logits written once
        ),
    )

    out2d = pl.pallas_call(
        _mlm_linear_kernel,
        out_shape=jax.ShapeDtypeStruct((M_pad, N_pad), out_dtype),
        grid_spec=pltpu.PrefetchScalarGridSpec(
            num_scalar_prefetch=0,
            grid=grid,
            in_specs=[
                pl.BlockSpec((tm, K), lambda i, j: (i, 0)),   # x panel (const over j)
                pl.BlockSpec((tn, K), lambda i, j: (j, 0)),   # W tile (vocab, hidden)
                pl.BlockSpec((1, tn), lambda i, j: (0, j)),   # bias tile
            ],
            out_specs=pl.BlockSpec((tm, tn), lambda i, j: (i, j)),
        ),
        compiler_params=pltpu.CompilerParams(
            dimension_semantics=("parallel", "parallel"),
            vmem_limit_bytes=56 * 1024 * 1024,  # safe on v7x (64 MiB physical)
        ),
        cost_estimate=cost,
    )(x2d, w, b2d)

    if (M_pad, N_pad) != (M, N):
        out2d = out2d[:M, :N]
    return out2d.reshape(batch, seq, vocab)


if __name__ == "__main__":
    # Small shapes consistent with the module: hidden=32, vocab_size=64
    batch, seq, hidden, vocab = 2, 8, 32, 64

    key = jax.random.PRNGKey(0)
    kx, kw, kb = jax.random.split(key, 3)

    x = jax.random.normal(kx, (batch, seq, hidden), dtype=jnp.float32)
    # Deterministic init mimicking nn.Linear's uniform(-1/sqrt(hidden), 1/sqrt(hidden))
    bound = 1.0 / (hidden ** 0.5)
    weight = jax.random.uniform(kw, (vocab, hidden), minval=-bound, maxval=bound,
                                dtype=jnp.float32)
    bias = jax.random.uniform(kb, (vocab,), minval=-bound, maxval=bound,
                              dtype=jnp.float32)

    out = masked_language_model_forward(x, weight, bias)
    out = jax.block_until_ready(out)

    # Correctness check against plain-JAX reference (strict f32 path).
    ref = x @ weight.T + bias
    assert out.shape == (batch, seq, vocab)
    assert jnp.allclose(out, ref, atol=1e-5, rtol=1e-5)

    print("KERNEL_OK")
</pallas_src>

<mosaic_0001>
module attributes {stable_mosaic.version = 11 : i64} {
  func.func @_mlm_linear_kernel(%arg0: i32, %arg1: i32, %arg2: memref<16x32xf32, #tpu.memory_space<vmem>>, %arg3: memref<64x32xf32, #tpu.memory_space<vmem>>, %arg4: memref<1x64xf32, #tpu.memory_space<vmem>>, %arg5: memref<16x64xf32, #tpu.memory_space<vmem>>) attributes {dimension_semantics = [#tpu.dimension_semantics<parallel>, #tpu.dimension_semantics<parallel>], iteration_bounds = array<i64: 1, 1>, scalar_prefetch = 0 : i64, scratch_operands = 0 : i64, tpu.core_type = #tpu.core_type<tc>, window_params = [{transform_indices = @transform_0, window_bounds = array<i64: 16, 32>}, {transform_indices = @transform_1, window_bounds = array<i64: 64, 32>}, {transform_indices = @transform_2, window_bounds = array<i64: 1, 64>}, {transform_indices = @transform_3, window_bounds = array<i64: 16, 64>}]} {
    %c0 = arith.constant 0 : index
    %c0_0 = arith.constant 0 : index
    %0 = vector.load %arg2[%c0, %c0_0] : memref<16x32xf32, #tpu.memory_space<vmem>>, vector<16x32xf32>
    %c0_1 = arith.constant 0 : index
    %c0_2 = arith.constant 0 : index
    %1 = vector.load %arg3[%c0_1, %c0_2] : memref<64x32xf32, #tpu.memory_space<vmem>>, vector<64x32xf32>
    %cst = arith.constant dense<0.000000e+00> : vector<16x64xf32>
    %2 = tpu.matmul %0, %1, %cst {dimension_numbers = #tpu.dot_dimension_numbers<[1], [1], [0], [0], [0, 0, 1, 0], [], []>} : vector<16x32xf32>, vector<64x32xf32>, vector<16x64xf32> -> vector<16x64xf32>
    %c0_3 = arith.constant 0 : index
    %c0_4 = arith.constant 0 : index
    %3 = vector.load %arg4[%c0_3, %c0_4] : memref<1x64xf32, #tpu.memory_space<vmem>>, vector<1x64xf32>
    %4 = vector.broadcast %3 : vector<1x64xf32> to vector<16x64xf32>
    %5 = arith.addf %2, %4 : vector<16x64xf32>
    %c0_5 = arith.constant 0 : index
    %c0_6 = arith.constant 0 : index
    %6 = vector.load %arg5[%c0_5, %c0_6] : memref<16x64xf32, #tpu.memory_space<vmem>>, vector<16x64xf32>
    tpu.vector_store %arg5[%c0_5, %c0_6], %5 {strides = array<i32>} : memref<16x64xf32, #tpu.memory_space<vmem>>, vector<16x64xf32>,
    return
  }
  func.func @transform_0(%arg0: i32, %arg1: i32) -> (i32, i32) {
    %c0_i32 = arith.constant 0 : i32
    %c0_i32_0 = arith.constant 0 : i32
    return %arg0, %c0_i32 : i32, i32
  }
  func.func @transform_1(%arg0: i32, %arg1: i32) -> (i32, i32) {
    %c0_i32 = arith.constant 0 : i32
    %c0_i32_0 = arith.constant 0 : i32
    return %arg1, %c0_i32 : i32, i32
  }
  func.func @transform_2(%arg0: i32, %arg1: i32) -> (i32, i32) {
    %c0_i32 = arith.constant 0 : i32
    %c0_i32_0 = arith.constant 0 : i32
    return %c0_i32, %arg1 : i32, i32
  }
  func.func @transform_3(%arg0: i32, %arg1: i32) -> (i32, i32) {
    %c0_i32 = arith.constant 0 : i32
    return %arg0, %arg1 : i32, i32
  }
}

</mosaic_0001>

<llo_original>
// kernel: tpu_custom_call.1
$region0: #{tpu_custom_call.1}
  #allocation0 [shape = 'u32[]', space=smem, size = 0x4, offset = 0x4, fixed_abs, tag = 'smem constant byte address 0x4 - core index']
  #allocation1 [shape = 'u32[72,128]{1,0:T(1,128)}', space=vmem, size = 0x9000, scoped, tag = 'internal scratch']
  %s0 = inlined_call_operand.vmem [shape: f32[16,32], index: 0, kind: input, shape index: {}]
  %s1 = inlined_call_operand.vmem [shape: f32[64,32], index: 1, kind: input, shape index: {}]
  %s2 = inlined_call_operand.vmem [shape: f32[1,64], index: 2, kind: input, shape index: {}]
  %s3 = inlined_call_operand.hbm [shape: f32[16,64], index: 3, kind: output, shape index: {}]
  %s4 = sld [smem:[#allocation0]]
  $region22: #{tpu_custom_call.1} parent=0
    _
  %s6 = ssub.s32 1, %s4
  %s7 = scalar_select 0, %s6, %s4
  $region1: #{tpu_custom_call.1} parent=0
    #allocation2 [shape = 'u8[8192]{0}', space=vmem, size = 0x2000, scoped, tag = 'output window, operand 0, single buffered']
    #allocation3 [shape = 's32[1]{0}', space=sflag, size = 0x4, scoped, tag = 'scoped memory for tpu_custom_call.1']
    %8 = vsyncpa [#allocation3], 0
    // Predicated region
    $region2: #{tpu_custom_call.1} parent=1 // pred_check
      _
    $region3: #{tpu_custom_call.1} parent=1 // pred_check_branch
      %10 = sbr.rel (0) target = $region5
    $region4: #{tpu_custom_call.1} parent=1 // pred_region
      _
    $region5: #{tpu_custom_call.1} parent=1 // pred_fallthru
      _
    // Predicated region
    $region6: #{tpu_custom_call.1} parent=1 // pred_check
      _
    $region7: #{tpu_custom_call.1} parent=1 // pred_check_branch
      %12 = sbr.rel (0) target = $region9
    $region8: #{tpu_custom_call.1} parent=1 // pred_region
      _
    $region9: #{tpu_custom_call.1} parent=1 // pred_fallthru
      _
    // Predicated region
    $region10: #{tpu_custom_call.1} parent=1 // pred_check
      _
    $region11: #{tpu_custom_call.1} parent=1 // pred_check_branch
      %14 = sbr.rel (0) target = $region13
    $region12: #{tpu_custom_call.1} parent=1 // pred_region
      _
    $region13: #{tpu_custom_call.1} parent=1 // pred_fallthru
      _
    %v15 = vld [vmem:[%s0] sm:$0xff]
    %v16 = vld [vmem:[%s0 + $0x8] sm:$0xff]
    %v17 = vld [vmem:[%s1] sm:$0xff]
    %v18 = vld [vmem:[%s1 + $0x8] sm:$0xff]
    %v19 = vld [vmem:[%s1 + $0x10] sm:$0xff]
    %v20 = vld [vmem:[%s1 + $0x18] sm:$0xff]
    %v21 = vld [vmem:[%s1 + $0x20] sm:$0xff]
    %v22 = vld [vmem:[%s1 + $0x28] sm:$0xff]
    %v23 = vld [vmem:[%s1 + $0x30] sm:$0xff]
    %v24 = vld [vmem:[%s1 + $0x38] sm:$0xff]
    %v25 = vld [vmem:[%s2] sm:$0x1]
    %v27 = vperm.slane %v25, 0
    %vm29 = vcmask 261120
    %v31 = vsel %vm29, %v15, 0
    %v34 = vsel %vm29, %v16, 0
    %v37 = vsel %vm29, %v17, 0
    %v40 = vsel %vm29, %v18, 0
    %v43 = vsel %vm29, %v19, 0
    %v46 = vsel %vm29, %v20, 0
    %v49 = vsel %vm29, %v21, 0
    %v52 = vsel %vm29, %v22, 0
    %v55 = vsel %vm29, %v23, 0
    %v58 = vsel %vm29, %v24, 0
    %60 = vmatpush.xpose.msra.mxu0 0.0
    %61 = vmatpush.xpose.msra.mxu0 0.0
    %62 = vmatpush.xpose.msra.mxu0 0.0
    %63 = vmatpush.xpose.msra.mxu0 0.0
    %64 = vmatpush.xpose.msra.mxu0 0.0
    %65 = vmatpush.xpose.msra.mxu0 0.0
    %66 = vmatpush.xpose.msra.mxu0 0.0
    %67 = vmatpush.xpose.msra.mxu0 0.0
    %68 = vmatpush.xpose.msra.mxu0 %v58
    %69 = vmatpush.xpose.msra.mxu0 %v55
    %70 = vmatpush.xpose.msra.mxu0 %v52
    %71 = vmatpush.xpose.msra.mxu0 %v49
    %72 = vmatpush.xpose.msra.mxu0 %v46
    %73 = vmatpush.xpose.msra.mxu0 %v43
    %74 = vmatpush.xpose.msra.mxu0 %v40
    %75 = vmatpush.xpose.msra.mxu0 %v37
    %76 = vmatmul.f32.gmra.mxu0 %v31
    %v77 = vpop.f32.mrf.mxu0
    %v78 = vadd.f32 %v27, %v77
    %79 = vmatmul.f32.gmra.mxu0 %v34
    %v80 = vpop.f32.mrf.mxu0
    %v81 = vadd.f32 %v27, %v80
    %82 = vdwg.mxu0
    %vm83 = vcmask 523264
    %84 = vst.msk [vmem:[#allocation2] sm:$0xff] %vm83, %v78
    %85 = vst.msk [vmem:[#allocation2 + $0x8] sm:$0xff] %vm83, %v81
    // Predicated region
    $region14: #{tpu_custom_call.1} parent=1 // pred_check
      _
    $region15: #{tpu_custom_call.1} parent=1 // pred_check_branch
      %87 = sbr.rel (0) target = $region17
    $region16: #{tpu_custom_call.1} parent=1 // pred_region
      %89 = vsyncadd [#allocation3], 0
      %s90 = sshll.u32 [#allocation2], 4
      %s91 = int_to_ptr.vmem [resolvable:$true] %s90
      %s92 = sshll.u32 %s3, 4
      %s93 = int_to_ptr.hbm [resolvable:$true] %s92
      %98 = dma.vmem_to_hbm [thread:$0]  %s91, 256, %s93, [#allocation3], 128, 128, 8
    $region17: #{tpu_custom_call.1} parent=1 // pred_fallthru
      _
    // Predicated region
    $region18: #{tpu_custom_call.1} parent=1 // pred_check
      _
    $region19: #{tpu_custom_call.1} parent=1 // pred_check_branch
      %100 = sbr.rel (0) target = $region21
    $region20: #{tpu_custom_call.1} parent=1 // pred_region
      %102 = dma.done [#allocation3], 256
    $region21: #{tpu_custom_call.1} parent=1 // pred_fallthru
      _
    %103 = vsyncpa [#allocation3], 1

</llo_original>
